<compile_context>
chip_gen: v7x
topology: tpu7x:2x2x1
jax: 0.10.0
libtpu: 0.0.40
codegen_flags: <defaults>
</compile_context>

<pallas_src>
import functools

import jax
import jax.numpy as jnp
from jax.experimental import pallas as pl
from jax.experimental.pallas import tpu as pltpu

LANES = 128
SUBLANES = 8
MAX_TILE_ROWS = 2048   # (2048, 128) f32 block = 1 MiB per input per pipeline buffer
NUM_SPLITS = 2         # leading "parallel" grid axis -> megacore split on v7x


def _round_up(n, m):
    return ((n + m - 1) // m) * m


def _l2_kernel(x_ref, y_ref, o_ref, *, tiles_per_split, valid_rows, needs_mask):
    """Accumulate sum((x - y)^2) for this split into the resident (1,8,128) output block."""
    i = pl.program_id(1)

    @pl.when(i == 0)
    def _():
        o_ref[...] = jnp.zeros_like(o_ref)

    tile_rows, lanes = x_ref.shape
    d = x_ref[...].astype(jnp.float32) - y_ref[...].astype(jnp.float32)

    if needs_mask:
        # Global (logical) row index of every element in this tile; rows past the
        # real array (partial last tile / phantom tiles of the megacore split)
        # contribute zero.  Pure VPU work, hidden under the DMA stream.
        tile_idx = pl.program_id(0) * tiles_per_split + i
        row_ids = tile_idx * tile_rows + jax.lax.broadcasted_iota(
            jnp.int32, (tile_rows, lanes), 0)
        d = jnp.where(row_ids < valid_rows, d, jnp.float32(0.0))

    sq = d * d
    # Reduce only over the leading (non-layout) axis: a chain of vreg adds on the
    # VPU, no XLU in the hot loop.  (tile_rows, 128) -> (tile_rows//8, 8, 128).
    partial = jnp.sum(sq.reshape(tile_rows // SUBLANES, SUBLANES, lanes), axis=0)
    o_ref[...] += partial.reshape(1, SUBLANES, lanes)


def l2_loss(x, y):
    assert x.shape == y.shape, "input and target must have the same shape"
    total_n = x.size

    xf = jnp.ravel(x)              # keep original dtype -> no extra HBM traffic
    yf = jnp.ravel(y)

    valid_rows = total_n // LANES  # lane-aligned bulk handled by the kernel
    bulk_n = valid_rows * LANES

    sum_sq = jnp.float32(0.0)

    if valid_rows > 0:
        x2d = xf[:bulk_n].reshape(valid_rows, LANES)   # no-op when total_n % 128 == 0
        y2d = yf[:bulk_n].reshape(valid_rows, LANES)

        tile_rows = min(MAX_TILE_ROWS, _round_up(valid_rows, SUBLANES))
        num_tiles = (valid_rows + tile_rows - 1) // tile_rows
        splits = NUM_SPLITS if num_tiles >= NUM_SPLITS else 1
        tiles_per_split = (num_tiles + splits - 1) // splits
        coverage_rows = splits * tiles_per_split * tile_rows
        needs_mask = coverage_rows != valid_rows

        def in_map(c, i):
            # Clamp phantom tiles (from uneven split / partial last tile) onto the
            # last real block; their contribution is zeroed by the in-kernel mask.
            tile = c * tiles_per_split + i
            return (jnp.minimum(tile, num_tiles - 1), 0)

        kernel = functools.partial(
            _l2_kernel,
            tiles_per_split=tiles_per_split,
            valid_rows=valid_rows,
            needs_mask=needs_mask,
        )

        itemsize = x.dtype.itemsize + y.dtype.itemsize
        partials = pl.pallas_call(
            kernel,
            out_shape=jax.ShapeDtypeStruct((splits, SUBLANES, LANES), jnp.float32),
            grid_spec=pltpu.PrefetchScalarGridSpec(
                num_scalar_prefetch=0,
                grid=(splits, tiles_per_split),
                in_specs=[
                    pl.BlockSpec((tile_rows, LANES), in_map),
                    pl.BlockSpec((tile_rows, LANES), in_map),
                ],
                out_specs=pl.BlockSpec((1, SUBLANES, LANES), lambda c, i: (c, 0, 0)),
            ),
            compiler_params=pltpu.CompilerParams(
                dimension_semantics=("parallel", "arbitrary"),
                vmem_limit_bytes=32 * 1024 * 1024,
            ),
            cost_estimate=pl.CostEstimate(
                flops=3 * bulk_n,
                transcendentals=0,
                bytes_accessed=bulk_n * itemsize + splits * SUBLANES * LANES * 4,
            ),
        )(x2d, y2d)

        sum_sq = sum_sq + jnp.sum(partials, dtype=jnp.float32)

    if bulk_n < total_n:
        # Sub-128-element remainder: trivial, handled in plain JAX (avoids padding
        # the whole tensor).  Degenerate inputs with < 128 elements take only this path.
        td = xf[bulk_n:].astype(jnp.float32) - yf[bulk_n:].astype(jnp.float32)
        sum_sq = sum_sq + jnp.sum(td * td)

    return jnp.sqrt(sum_sq / jnp.float32(total_n))


if __name__ == "__main__":
    key = jax.random.PRNGKey(0)
    k1, k2 = jax.random.split(key)
    # NCHW-style example shapes (batch=2, channels=4, spatial=16x16)
    x = jax.random.normal(k1, (2, 4, 16, 16), dtype=jnp.float32)
    t = jax.random.normal(k2, (2, 4, 16, 16), dtype=jnp.float32)

    loss = l2_loss(x, t)
    jax.block_until_ready(loss)

    # reference check
    ref = jnp.sqrt(jnp.mean(jnp.abs(x - t) ** 2))
    assert jnp.allclose(loss, ref, rtol=1e-5, atol=1e-6), (loss, ref)

    print("KERNEL_OK")
</pallas_src>

<mosaic_0001>
module attributes {stable_mosaic.version = 11 : i64} {
  func.func @_l2_kernel(%arg0: i32, %arg1: i32, %arg2: memref<16x128xf32, #tpu.memory_space<vmem>>, %arg3: memref<16x128xf32, #tpu.memory_space<vmem>>, %arg4: memref<1x8x128xf32, #tpu.memory_space<vmem>>) attributes {dimension_semantics = [#tpu.dimension_semantics<parallel>, #tpu.dimension_semantics<arbitrary>], iteration_bounds = array<i64: 1, 1>, scalar_prefetch = 0 : i64, scratch_operands = 0 : i64, tpu.core_type = #tpu.core_type<tc>, window_params = [{transform_indices = @transform_0, window_bounds = array<i64: 16, 128>}, {transform_indices = @transform_1, window_bounds = array<i64: 16, 128>}, {transform_indices = @transform_2, window_bounds = array<i64: 1, 8, 128>}]} {
    %c0_i32 = arith.constant 0 : i32
    %0 = arith.cmpi eq, %arg1, %c0_i32 : i32
    %1 = arith.extui %0 : i1 to i32
    %c0_i32_0 = arith.constant 0 : i32
    %2 = arith.cmpi ne, %1, %c0_i32_0 : i32
    scf.if %2 {
      %cst_10 = arith.constant 0.000000e+00 : f32
      %13 = vector.broadcast %cst_10 : f32 to vector<1x8x128xf32>
      %c0_11 = arith.constant 0 : index
      %c0_12 = arith.constant 0 : index
      %c0_13 = arith.constant 0 : index
      %14 = vector.load %arg4[%c0_11, %c0_12, %c0_13] : memref<1x8x128xf32, #tpu.memory_space<vmem>>, vector<1x8x128xf32>
      tpu.vector_store %arg4[%c0_11, %c0_12, %c0_13], %13 {strides = array<i32>} : memref<1x8x128xf32, #tpu.memory_space<vmem>>, vector<1x8x128xf32>,
    } else {
    }
    %c0 = arith.constant 0 : index
    %c0_1 = arith.constant 0 : index
    %3 = vector.load %arg2[%c0, %c0_1] : memref<16x128xf32, #tpu.memory_space<vmem>>, vector<16x128xf32>
    %c0_2 = arith.constant 0 : index
    %c0_3 = arith.constant 0 : index
    %4 = vector.load %arg3[%c0_2, %c0_3] : memref<16x128xf32, #tpu.memory_space<vmem>>, vector<16x128xf32>
    %5 = arith.subf %3, %4 : vector<16x128xf32>
    %6 = arith.mulf %5, %5 : vector<16x128xf32>
    %7 = vector.shape_cast %6 : vector<16x128xf32> to vector<2x8x128xf32>
    %cst = arith.constant dense<0.000000e+00> : vector<8x128xf32>
    %8 = vector.multi_reduction <add>, %7, %cst [0] : vector<2x8x128xf32> to vector<8x128xf32>
    %c0_4 = arith.constant 0 : index
    %c0_5 = arith.constant 0 : index
    %c0_6 = arith.constant 0 : index
    %9 = vector.load %arg4[%c0_4, %c0_5, %c0_6] : memref<1x8x128xf32, #tpu.memory_space<vmem>>, vector<1x8x128xf32>
    %10 = vector.shape_cast %8 : vector<8x128xf32> to vector<1x8x128xf32>
    %11 = arith.addf %9, %10 : vector<1x8x128xf32>
    %c0_7 = arith.constant 0 : index
    %c0_8 = arith.constant 0 : index
    %c0_9 = arith.constant 0 : index
    %12 = vector.load %arg4[%c0_7, %c0_8, %c0_9] : memref<1x8x128xf32, #tpu.memory_space<vmem>>, vector<1x8x128xf32>
    tpu.vector_store %arg4[%c0_7, %c0_8, %c0_9], %11 {strides = array<i32>} : memref<1x8x128xf32, #tpu.memory_space<vmem>>, vector<1x8x128xf32>,
    return
  }
  func.func @transform_0(%arg0: i32, %arg1: i32) -> (i32, i32) {
    %c1_i32 = arith.constant 1 : i32
    %0 = arith.muli %arg0, %c1_i32 : i32
    %1 = arith.addi %0, %arg1 : i32
    %c0_i32 = arith.constant 0 : i32
    %2 = arith.minsi %1, %c0_i32 : i32
    %c0_i32_0 = arith.constant 0 : i32
    %c0_i32_1 = arith.constant 0 : i32
    return %2, %c0_i32_0 : i32, i32
  }
  func.func @transform_1(%arg0: i32, %arg1: i32) -> (i32, i32) {
    %c1_i32 = arith.constant 1 : i32
    %0 = arith.muli %arg0, %c1_i32 : i32
    %1 = arith.addi %0, %arg1 : i32
    %c0_i32 = arith.constant 0 : i32
    %2 = arith.minsi %1, %c0_i32 : i32
    %c0_i32_0 = arith.constant 0 : i32
    %c0_i32_1 = arith.constant 0 : i32
    return %2, %c0_i32_0 : i32, i32
  }
  func.func @transform_2(%arg0: i32, %arg1: i32) -> (i32, i32, i32) {
    %c0_i32 = arith.constant 0 : i32
    %c0_i32_0 = arith.constant 0 : i32
    %c0_i32_1 = arith.constant 0 : i32
    return %arg0, %c0_i32, %c0_i32_0 : i32, i32, i32
  }
}

</mosaic_0001>

<llo_original>
// kernel: tpu_custom_call.1
$region0: #{tpu_custom_call.1}
  #allocation0 [shape = 'u32[]', space=smem, size = 0x4, offset = 0x4, fixed_abs, tag = 'smem constant byte address 0x4 - core index']
  #allocation1 [shape = 'u32[144,128]{1,0:T(1,128)}', space=vmem, size = 0x12000, scoped, tag = 'internal scratch']
  %s0 = inlined_call_operand.hbm [shape: f32[16,128], index: 0, kind: input, shape index: {}]
  %s1 = inlined_call_operand.hbm [shape: f32[16,128], index: 1, kind: input, shape index: {}]
  %s2 = inlined_call_operand.hbm [shape: f32[1,8,128], index: 2, kind: output, shape index: {}]
  %s3 = sld [smem:[#allocation0]]
  $region30: #{tpu_custom_call.1} parent=0
    _
  %s5 = ssub.s32 1, %s3
  %s6 = scalar_select 0, %s5, %s3
  $region1: #{tpu_custom_call.1} parent=0
    #allocation2 [shape = 'u8[8192]{0}', space=vmem, size = 0x2000, scoped, tag = 'input window, operand 0, single buffered']
    #allocation3 [shape = 's32[1]{0}', space=sflag, size = 0x4, scoped, tag = 'scoped memory for tpu_custom_call.1']
    #allocation4 [shape = 's32[1]{0}', space=sflag, size = 0x4, scoped, tag = 'scoped memory for tpu_custom_call.1']
    #allocation5 [shape = 'u8[8192]{0}', space=vmem, size = 0x2000, scoped, tag = 'input window, operand 1, single buffered']
    #allocation6 [shape = 's32[1]{0}', space=sflag, size = 0x4, scoped, tag = 'scoped memory for tpu_custom_call.1']
    #allocation7 [shape = 'u8[4096]{0}', space=vmem, size = 0x1000, scoped, tag = 'output window, operand 0, single buffered']
    %7 = vsyncpa [#allocation3], 0
    %8 = vsyncpa [#allocation6], 0
    %9 = vsyncpa [#allocation4], 0
    // Predicated region
    $region2: #{tpu_custom_call.1} parent=1 // pred_check
      _
    $region3: #{tpu_custom_call.1} parent=1 // pred_check_branch
      %11 = sbr.rel (0) target = $region5
    $region4: #{tpu_custom_call.1} parent=1 // pred_region
      %s12 = sadd.s32 0, 0
      %p13 = scmp.lt.s32.totalorder %s12, 0
      %s14 = scalar_select %p13, %s12, 0
      %s15 = smul.u32 2, %s14
      %s17 = ssub.s32 256, 256
      %18 = vsyncadd [#allocation3], %s17
      %s19 = smul.addr %s15, 128
      %s20 = scalar_lea.hbm %s0, %s19
      %s21 = sshll.u32 [#allocation2], 4
      %s22 = int_to_ptr.vmem [resolvable:$true] %s21
      %27 = dma.hbm_to_vmem [thread:$0]  %s20, 256, %s22, [#allocation3], 128, 128, 8
    $region5: #{tpu_custom_call.1} parent=1 // pred_fallthru
      _
    // Predicated region
    $region6: #{tpu_custom_call.1} parent=1 // pred_check
      _
    $region7: #{tpu_custom_call.1} parent=1 // pred_check_branch
      %29 = sbr.rel (0) target = $region9
    $region8: #{tpu_custom_call.1} parent=1 // pred_region
      %s30 = sadd.s32 0, 0
      %p31 = scmp.lt.s32.totalorder %s30, 0
      %s32 = scalar_select %p31, %s30, 0
      %s33 = smul.u32 2, %s32
      %s35 = ssub.s32 256, 256
      %36 = vsyncadd [#allocation6], %s35
      %s37 = smul.addr %s33, 128
      %s38 = scalar_lea.hbm %s1, %s37
      %s39 = sshll.u32 [#allocation5], 4
      %s40 = int_to_ptr.vmem [resolvable:$true] %s39
      %45 = dma.hbm_to_vmem [thread:$0]  %s38, 256, %s40, [#allocation6], 128, 128, 8
    $region9: #{tpu_custom_call.1} parent=1 // pred_fallthru
      _
    // Predicated region
    $region10: #{tpu_custom_call.1} parent=1 // pred_check
      _
    $region11: #{tpu_custom_call.1} parent=1 // pred_check_branch
      %47 = sbr.rel (0) target = $region13
    $region12: #{tpu_custom_call.1} parent=1 // pred_region
      %48 = dma.done [#allocation3], 256
    $region13: #{tpu_custom_call.1} parent=1 // pred_fallthru
      _
    // Predicated region
    $region14: #{tpu_custom_call.1} parent=1 // pred_check
      _
    $region15: #{tpu_custom_call.1} parent=1 // pred_check_branch
      %50 = sbr.rel (0) target = $region17
    $region16: #{tpu_custom_call.1} parent=1 // pred_region
      %51 = dma.done [#allocation6], 256
    $region17: #{tpu_custom_call.1} parent=1 // pred_fallthru
      _
    %s52 = sadd.s32 0, 0
    %p53 = scmp.lt.s32.totalorder %s52, 0
    %s54 = scalar_select %p53, %s52, 0
    %s55 = smul.u32 2, %s54
    %s56 = sadd.s32 0, 0
    %p57 = scmp.lt.s32.totalorder %s56, 0
    %s58 = scalar_select %p57, %s56, 0
    %s59 = smul.u32 2, %s58
    %p60 = scmp.eq.s32.totalorder 0, 0
    // Predicated region
    $region18: #{tpu_custom_call.1} parent=1 // pred_check
      %p61 = pneg %p60
    $region19: #{tpu_custom_call.1} parent=1 // pred_check_branch
      %63 = sbr.rel (%p61) target = $region21
    $region20: #{tpu_custom_call.1} parent=1 // pred_region
      %64 = vst [vmem:[#allocation7] sm:$0xff] 0.0
    $region21: #{tpu_custom_call.1} parent=1 // pred_fallthru
      _
    %v65 = vld [vmem:[#allocation2] sm:$0xff]
    %v66 = vld [vmem:[#allocation2 + $0x8] sm:$0xff]
    %v67 = vld [vmem:[#allocation5] sm:$0xff]
    %v68 = vld [vmem:[#allocation5 + $0x8] sm:$0xff]
    %v69 = vsub.f32 %v65, %v67
    %v70 = vsub.f32 %v66, %v68
    %v71 = vmul.f32 %v69, %v69
    %v72 = vmul.f32 %v70, %v70
    %v73 = vadd.f32 %v71, %v72
    %v74 = vld [vmem:[#allocation7] sm:$0xff]
    %v75 = vadd.f32 %v74, %v73
    %76 = vst [vmem:[#allocation7] sm:$0xff] %v75
    // Predicated region
    $region22: #{tpu_custom_call.1} parent=1 // pred_check
      _
    $region23: #{tpu_custom_call.1} parent=1 // pred_check_branch
      %78 = sbr.rel (0) target = $region25
    $region24: #{tpu_custom_call.1} parent=1 // pred_region
      %s80 = ssub.s32 128, 128
      %81 = vsyncadd [#allocation4], %s80
      %s83 = sshll.u32 [#allocation7], 4
      %s84 = int_to_ptr.vmem [resolvable:$true] %s83
      %86 = dma.vmem_to_hbm [thread:$0]  %s84, 128, %s2, [#allocation4]
    $region25: #{tpu_custom_call.1} parent=1 // pred_fallthru
      _
    // Predicated region
    $region26: #{tpu_custom_call.1} parent=1 // pred_check
      _
    $region27: #{tpu_custom_call.1} parent=1 // pred_check_branch
      %88 = sbr.rel (0) target = $region29
    $region28: #{tpu_custom_call.1} parent=1 // pred_region
      %89 = dma.done [#allocation4], 128
    $region29: #{tpu_custom_call.1} parent=1 // pred_fallthru
      _
    %90 = vsyncpa [#allocation3], 1
    %91 = vsyncpa [#allocation6], 1
    %92 = vsyncpa [#allocation4], 1

</llo_original>
